<compile_context>
chip_gen: v7x
topology: tpu7x:2x2x1
jax: 0.10.0
libtpu: 0.0.40
codegen_flags: <defaults>
</compile_context>

<pallas_src>
import jax
import jax.numpy as jnp
from jax.experimental import pallas as pl
from jax.experimental.pallas import tpu as pltpu

# ---- small example sizes consistent with the module ctor ---------------------
B = 8            # number of "center" nodes
N = 8            # neighbors per node  (edge_emb / neibs have B*N rows)
INPUT_DIM = 32   # input_dim
EDGE_DIM = 16    # edge_dim

_LANES = 128                     # vreg lane width
_SUBLANES = 8                    # vreg sublane count (block row granularity)
_TARGET_BLOCK_BYTES = 2 << 20    # ~2 MiB blocks: overhead-amortized, fits all gens


def _copy_kernel(src_ref, dst_ref):
    # forward(x, neibs, edge_emb, mask) == edge_emb  -> straight copy.
    dst_ref[...] = src_ref[...]


def _pallas_copy_2d(arr2d):
    """Tiled identity copy of a 2-D array (rows tiled, full last dim)."""
    rows, cols = arr2d.shape
    itemsize = arr2d.dtype.itemsize
    row_bytes = max(cols * itemsize, 1)

    # Largest multiple-of-8 row count near the ~2 MiB target.
    block_rows = (_TARGET_BLOCK_BYTES // row_bytes) // _SUBLANES * _SUBLANES
    block_rows = max(block_rows, _SUBLANES)
    if block_rows >= rows:
        block_rows = rows  # single full-array block (always a legal block shape)

    grid = (pl.cdiv(rows, block_rows),)        # ragged last block handled by Pallas
    spec = pl.BlockSpec((block_rows, cols), lambda i: (i, 0))

    return pl.pallas_call(
        _copy_kernel,
        grid=grid,
        in_specs=[spec],
        out_specs=spec,
        out_shape=jax.ShapeDtypeStruct((rows, cols), arr2d.dtype),
        input_output_aliases={0: 0},           # output reuses the input buffer
        compiler_params=pltpu.CompilerParams(
            dimension_semantics=("parallel",)),  # v7x: both TCs split the copy
    )(arr2d)


@jax.jit
def _id_edge_forward(edge_emb):
    rows, e_dim = edge_emb.shape
    total = rows * e_dim
    if total % _LANES == 0:
        # Lane-dense view: every store is a full 128-lane vst (no vst.msk).
        dense = edge_emb.reshape(total // _LANES, _LANES)
        return _pallas_copy_2d(dense).reshape(rows, e_dim)
    # Fallback for element counts not 128-aligned: tile rows, keep the
    # (narrow) full last dim -- still grid-pipelined and VMEM-safe.
    return _pallas_copy_2d(edge_emb)


def id_edge_aggregator(x, neibs, edge_emb, mask=None, *, use_pallas=True):
    """Pallas implementation of IdEdgeAggregator.forward (returns edge_emb).

    x, neibs, mask mirror the PyTorch signature but are unused (exactly like
    the module) and are never sent to the device kernel.
    """
    del x, neibs, mask  # dead in the module's forward
    if not use_pallas:
        # Review's top recommendation: the op is an identity -> zero cost.
        return edge_emb
    return _id_edge_forward(edge_emb)


def reference_forward(x, neibs, edge_emb, mask=None):
    """Pure-JAX mirror of IdEdgeAggregator.forward."""
    del x, neibs, mask
    return edge_emb


if __name__ == "__main__":
    root = jax.random.PRNGKey(0)
    k_x, k_nb, k_e, k_m = jax.random.split(root, 4)

    x = jax.random.normal(k_x, (B, INPUT_DIM), dtype=jnp.float32)
    neibs = jax.random.normal(k_nb, (B * N, INPUT_DIM), dtype=jnp.float32)
    edge_emb = jax.random.normal(k_e, (B * N, EDGE_DIM), dtype=jnp.float32)
    mask = jax.random.bernoulli(k_m, 0.5, (B, N)).astype(jnp.float32)

    out = jax.block_until_ready(id_edge_aggregator(x, neibs, edge_emb, mask))
    ref = jax.block_until_ready(reference_forward(x, neibs, edge_emb, mask))

    assert out.shape == (B * N, EDGE_DIM), out.shape
    assert out.dtype == edge_emb.dtype, out.dtype
    assert jnp.array_equal(out, ref), float(jnp.max(jnp.abs(out - ref)))
    print("KERNEL_OK")
</pallas_src>

<mosaic_0001>
module attributes {stable_mosaic.version = 11 : i64} {
  func.func @_copy_kernel(%arg0: i32, %arg1: memref<8x128xf32, #tpu.memory_space<vmem>>, %arg2: memref<8x128xf32, #tpu.memory_space<vmem>>) attributes {dimension_semantics = [#tpu.dimension_semantics<parallel>], iteration_bounds = array<i64: 1>, scalar_prefetch = 0 : i64, scratch_operands = 0 : i64, tpu.core_type = #tpu.core_type<tc>, window_params = [{transform_indices = @transform_0, window_bounds = array<i64: 8, 128>}, {transform_indices = @transform_1, window_bounds = array<i64: 8, 128>}]} {
    %c0 = arith.constant 0 : index
    %c0_0 = arith.constant 0 : index
    %0 = vector.load %arg1[%c0, %c0_0] : memref<8x128xf32, #tpu.memory_space<vmem>>, vector<8x128xf32>
    %c0_1 = arith.constant 0 : index
    %c0_2 = arith.constant 0 : index
    %1 = vector.load %arg2[%c0_1, %c0_2] : memref<8x128xf32, #tpu.memory_space<vmem>>, vector<8x128xf32>
    tpu.vector_store %arg2[%c0_1, %c0_2], %0 {strides = array<i32>} : memref<8x128xf32, #tpu.memory_space<vmem>>, vector<8x128xf32>,
    return
  }
  func.func @transform_0(%arg0: i32) -> (i32, i32) {
    %c0_i32 = arith.constant 0 : i32
    %c0_i32_0 = arith.constant 0 : i32
    return %arg0, %c0_i32 : i32, i32
  }
  func.func @transform_1(%arg0: i32) -> (i32, i32) {
    %c0_i32 = arith.constant 0 : i32
    %c0_i32_0 = arith.constant 0 : i32
    return %arg0, %c0_i32 : i32, i32
  }
}

</mosaic_0001>

<llo_original>
// kernel: _id_edge_forward.1
$region0: #{_id_edge_forward.1}
  #allocation0 [shape = 'u32[]', space=smem, size = 0x4, offset = 0x4, fixed_abs, tag = 'smem constant byte address 0x4 - core index']
  #allocation1 [shape = 'u32[144,128]{1,0:T(1,128)}', space=vmem, size = 0x12000, scoped, tag = 'internal scratch']
  %s0 = inlined_call_operand.vmem [shape: f32[8,128], index: 0, kind: input, shape index: {}, may-alias: {0,1}]
  %s1 = inlined_call_operand.vmem [shape: f32[8,128], index: 1, kind: output, shape index: {}, may-alias: {0,1}]
  %s2 = sld [smem:[#allocation0]]
  $region14: #{_id_edge_forward.1} parent=0
    _
  %s4 = ssub.s32 1, %s2
  %s5 = scalar_select 0, %s4, %s2
  // Predicated region
  $region2: #{_id_edge_forward.1} parent=0 // pred_check
    _
  $region3: #{_id_edge_forward.1} parent=0 // pred_check_branch
    %7 = sbr.rel (0) target = $region5
  $region4: #{_id_edge_forward.1} parent=0 // pred_region
    _
  $region5: #{_id_edge_forward.1} parent=0 // pred_fallthru
    _
  %v8 = vld [vmem:[%s0] sm:$0xff]
  %9 = vst [vmem:[%s1] sm:$0xff] %v8
  // Predicated region
  $region6: #{_id_edge_forward.1} parent=0 // pred_check
    _
  $region7: #{_id_edge_forward.1} parent=0 // pred_check_branch
    %11 = sbr.rel (0) target = $region9
  $region8: #{_id_edge_forward.1} parent=0 // pred_region
    _
  $region9: #{_id_edge_forward.1} parent=0 // pred_fallthru
    _
  // Predicated region
  $region10: #{_id_edge_forward.1} parent=0 // pred_check
    _
  $region11: #{_id_edge_forward.1} parent=0 // pred_check_branch
    %13 = sbr.rel (0) target = $region13
  $region12: #{_id_edge_forward.1} parent=0 // pred_region
    _
  $region13: #{_id_edge_forward.1} parent=0 // pred_fallthru
    _

</llo_original>
